<compile_context>
chip_gen: v7x
topology: tpu7x:2x2x1
jax: 0.10.0
libtpu: 0.0.40
codegen_flags: <defaults>
</compile_context>

<pallas_src>
import math

import numpy as np
import jax
import jax.numpy as jnp
from jax.experimental import pallas as pl
from jax.experimental.pallas import tpu as pltpu

LANE = 128
BF16_SUBLANE = 16   # bf16 packs 16 rows per (8,128) f32-equivalent tile


def _round_up(n, m):
    return ((n + m - 1) // m) * m


# ----------------------------- Pallas kernel ------------------------------ #
def fused_ctx_mlp_kernel(h_ref, w1_ref, b1_ref, w2_ref, b2_ref, o_ref):
    """One batch tile of  o = SiLU(h @ W1 + b1) @ W2 + b2.

    h = [x | t | emb | ctx] is pre-fused (bf16) in the wrapper, so layer 1 is a
    single MXU push.  Accumulation and all elementwise math (bias, SiLU) stay
    f32; MXU operands and the final lane-dense (TM, 128) store are bf16.
    """
    z = jnp.dot(h_ref[...], w1_ref[...],
                preferred_element_type=jnp.float32) + b1_ref[...]
    a = z * jax.nn.sigmoid(z)                       # SiLU in f32 (exp -> EUP)
    o = jnp.dot(a.astype(jnp.bfloat16), w2_ref[...],
                preferred_element_type=jnp.float32) + b2_ref[...]
    o_ref[...] = o.astype(o_ref.dtype)              # unmasked full-lane bf16 vst


def fused_ctx_mlp(h, p, *, tm=None):
    """Batch-tiled pallas_call; weights stay VMEM-resident across tiles."""
    B, F = h.shape
    H = p["w1"].shape[1]
    D_pad = p["w2"].shape[1]

    # Tile choice: large tiles keep the HBM pipeline fed (>=512 rows is near
    # roofline), but keep >= 2 tiles when possible so the "parallel" batch
    # axis actually splits across v7x's two TensorCores (no-op on v5e/v6e).
    if tm is None:
        tm = min(1024, _round_up(pl.cdiv(B, 2), BF16_SUBLANE))
    tm = _round_up(min(tm, _round_up(B, BF16_SUBLANE)), BF16_SUBLANE)
    b_pad = _round_up(B, tm)
    if b_pad != B:
        h = jnp.pad(h, ((0, b_pad - B), (0, 0)))
    n_tiles = b_pad // tm

    def nbytes(shape, dtype):
        return math.prod(shape) * jnp.dtype(dtype).itemsize

    # double-buffered streaming tiles + (double-buffered) resident weights
    tile_bytes = 2 * (nbytes((tm, F), jnp.bfloat16)
                      + nbytes((tm, D_pad), jnp.bfloat16))
    w_bytes = 2 * (nbytes((F, H), jnp.bfloat16)
                   + nbytes((H, D_pad), jnp.bfloat16)
                   + nbytes((1, H), jnp.float32)
                   + nbytes((1, D_pad), jnp.float32))
    # explicit budget (v7x has only 64 MiB VMEM total; keep well under ~48 MiB)
    vmem_limit = int(min((8 << 20) + tile_bytes + w_bytes, 48 << 20))

    # TODO(synk): on v7x with large H/D_out, mark the constant-index weight
    # BlockSpecs pipeline_mode=pl.Buffered(1) (double-buffering constants is
    # wasted VMEM); negligible at H=128 so left at the default here.
    out = pl.pallas_call(
        fused_ctx_mlp_kernel,
        out_shape=jax.ShapeDtypeStruct((b_pad, D_pad), jnp.bfloat16),
        grid=(n_tiles,),
        in_specs=[
            pl.BlockSpec((tm, F), lambda i: (i, 0)),        # fused h tile (bf16)
            pl.BlockSpec((F, H), lambda i: (0, 0)),         # W1 (VMEM-resident)
            pl.BlockSpec((1, H), lambda i: (0, 0)),         # b1
            pl.BlockSpec((H, D_pad), lambda i: (0, 0)),     # W2 (col-padded to 128)
            pl.BlockSpec((1, D_pad), lambda i: (0, 0)),     # b2 (col-padded)
        ],
        out_specs=pl.BlockSpec((tm, D_pad), lambda i: (i, 0)),
        compiler_params=pltpu.CompilerParams(
            dimension_semantics=("parallel",),   # v7x: 2 TCs split batch tiles
            vmem_limit_bytes=vmem_limit,
        ),
    )(h, p["w1"], p["b1"], p["w2"], p["b2"])
    return out[:B]


# ----------------------- parameter preparation ---------------------------- #
def prepare_params(raw, d_x, kd, e, d_c):
    """One-time prep (outside the ODE step loop): cast MXU operands to bf16,
    zero-pad W2/b2 columns to a lane-dense multiple of 128 (padding is sliced
    off after the kernel; results are identical)."""
    w1, b1, w2, b2 = raw["w1"], raw["b1"], raw["w2"], raw["b2"]
    f_total = d_x + 1 + kd * e + d_c
    assert w1.shape[0] == f_total
    d_out = w2.shape[1]
    d_pad = _round_up(d_out, LANE)
    return {
        "embedding": raw["embedding"].astype(jnp.bfloat16),
        "w1": w1.astype(jnp.bfloat16),
        "b1": b1.reshape(1, -1).astype(jnp.float32),
        "w2": jnp.pad(w2, ((0, 0), (0, d_pad - d_out))).astype(jnp.bfloat16),
        "b2": jnp.pad(b2.reshape(1, -1),
                      ((0, 0), (0, d_pad - d_out))).astype(jnp.float32),
        "d_out": d_out,
    }


# ----------------------- ContextWrapper equivalent ------------------------ #
def reshape_time_like(t, x):
    """Mirror of ContextWrapper.reshape_time_like."""
    if isinstance(t, (float, int)):
        return t
    return t.reshape((-1,) + (1,) * (x.ndim - 1))


def context_wrapper_forward(t, x, params, context_discrete=None,
                            context_continuous=None, *, tm=None):
    """Mirror of ContextWrapper.forward:
        t = t.repeat(x.shape[0]); t = reshape_time_like(t, x)
        return nn(x_continuous=x, times=t, context_discrete=..., context_continuous=...)
    The repeated time enters the kernel as the time column of the fused h
    operand, so per-row values are exact (single MXU dot handles it).
    """
    B = x.shape[0]
    t_arr = jnp.asarray(t, jnp.float32).reshape(-1)
    if t_arr.shape[0] != 1:
        # ContextWrapper's repeat semantics assume a single time value per call;
        # assert instead of silently truncating (per review).
        raise ValueError("ContextWrapper expects a single (size-1) time value")
    t_rep = jnp.tile(t_arr, B)               # t.repeat(B)
    t_col = reshape_time_like(t_rep, x)      # (B, 1)

    # embedding gather stays in JAX glue (tiny table, one XLA gather)
    emb = params["embedding"][context_discrete].reshape(B, -1)  # (B, Kd*E) bf16

    # Fuse concat + time-broadcast once (bf16): one lane-aligned F-wide input
    # stream, one MXU push for layer 1 inside the kernel.
    h = jnp.concatenate(
        [x.astype(jnp.bfloat16), t_col.astype(jnp.bfloat16),
         emb.astype(jnp.bfloat16), context_continuous.astype(jnp.bfloat16)],
        axis=-1)

    out = fused_ctx_mlp(h, params, tm=tm)
    # TODO(synk): in the real ODE solver, keep the 128-lane-padded bf16 vector
    # field end-to-end across steps and move the stepping loop inside one
    # pallas_call (weights VMEM-resident across steps, or cross-call weight
    # prefetch) to amortize launch + weight-DMA per step.
    return out[:, :params["d_out"]].astype(jnp.float32)


# --------------------------------- main ----------------------------------- #
if __name__ == "__main__":
    B = 64         # batch; auto tile -> tm=32, grid=(2,) so both v7x TCs work
    D_x = 16       # continuous state dim (x_continuous)
    Kd = 4         # number of discrete context tokens
    V = 10         # discrete vocab size
    E = 8          # embedding dim  -> Kd*E = 32
    Dc = 15        # continuous context dim
    F = D_x + 1 + Kd * E + Dc   # = 64: layer-1 K is exactly one 64-wide dot
    H = 128        # hidden width
    D_out = D_x    # vector field output dim (same shape as x)

    key = jax.random.PRNGKey(0)
    kx, kt, kcd, kcc, ke, k1, k2 = jax.random.split(key, 7)

    x = jax.random.normal(kx, (B, D_x), dtype=jnp.float32)
    t = jax.random.uniform(kt, (1,), dtype=jnp.float32)
    context_discrete = jax.random.randint(kcd, (B, Kd), 0, V)
    context_continuous = jax.random.normal(kcc, (B, Dc), dtype=jnp.float32)

    raw = {
        "embedding": jax.random.normal(ke, (V, E), dtype=jnp.float32) * 0.1,
        "w1": jax.random.normal(k1, (F, H), dtype=jnp.float32) * (1.0 / jnp.sqrt(F)),
        "b1": jnp.zeros((1, H), dtype=jnp.float32),
        "w2": jax.random.normal(k2, (H, D_out), dtype=jnp.float32) * (1.0 / jnp.sqrt(H)),
        "b2": jnp.zeros((1, D_out), dtype=jnp.float32),
    }
    params = prepare_params(raw, D_x, Kd, E, Dc)

    out = context_wrapper_forward(
        t, x, params,
        context_discrete=context_discrete,
        context_continuous=context_continuous)
    jax.block_until_ready(out)
    assert out.shape == (B, D_out) and out.dtype == jnp.float32

    # Pure-JAX f32 reference of the same forward (loose tol: kernel uses bf16
    # activations/weights/output with f32 accumulation).
    emb_ref = raw["embedding"][context_discrete].reshape(B, -1)
    t_col_ref = jnp.broadcast_to(jnp.asarray(t, jnp.float32).reshape(-1)[:1],
                                 (B,)).reshape(B, 1)
    h_ref = jnp.concatenate([x, t_col_ref, emb_ref, context_continuous], axis=-1)
    z_ref = h_ref @ raw["w1"] + raw["b1"]
    a_ref = z_ref * jax.nn.sigmoid(z_ref)
    ref = a_ref @ raw["w2"] + raw["b2"]
    np.testing.assert_allclose(np.asarray(out), np.asarray(ref), atol=5e-2, rtol=5e-2)

    print("KERNEL_OK")
</pallas_src>

<mosaic_0001>
module attributes {stable_mosaic.version = 11 : i64} {
  func.func @fused_ctx_mlp_kernel(%arg0: i32, %arg1: memref<32x64xbf16, #tpu.memory_space<vmem>>, %arg2: memref<64x128xbf16, #tpu.memory_space<vmem>>, %arg3: memref<1x128xf32, #tpu.memory_space<vmem>>, %arg4: memref<128x128xbf16, #tpu.memory_space<vmem>>, %arg5: memref<1x128xf32, #tpu.memory_space<vmem>>, %arg6: memref<32x128xbf16, #tpu.memory_space<vmem>>) attributes {dimension_semantics = [#tpu.dimension_semantics<parallel>], iteration_bounds = array<i64: 2>, scalar_prefetch = 0 : i64, scratch_operands = 0 : i64, tpu.core_type = #tpu.core_type<tc>, window_params = [{transform_indices = @transform_0, window_bounds = array<i64: 32, 64>}, {pipeline_mode = #tpu.pipeline_mode<synchronous>, transform_indices = @transform_1, window_bounds = array<i64: 64, 128>}, {pipeline_mode = #tpu.pipeline_mode<synchronous>, transform_indices = @transform_2, window_bounds = array<i64: 1, 128>}, {pipeline_mode = #tpu.pipeline_mode<synchronous>, transform_indices = @transform_3, window_bounds = array<i64: 128, 128>}, {pipeline_mode = #tpu.pipeline_mode<synchronous>, transform_indices = @transform_4, window_bounds = array<i64: 1, 128>}, {transform_indices = @transform_5, window_bounds = array<i64: 32, 128>}]} {
    %c0 = arith.constant 0 : index
    %c0_0 = arith.constant 0 : index
    %0 = vector.load %arg1[%c0, %c0_0] : memref<32x64xbf16, #tpu.memory_space<vmem>>, vector<32x64xbf16>
    %c0_1 = arith.constant 0 : index
    %c0_2 = arith.constant 0 : index
    %1 = vector.load %arg2[%c0_1, %c0_2] : memref<64x128xbf16, #tpu.memory_space<vmem>>, vector<64x128xbf16>
    %cst = arith.constant dense<0.000000e+00> : vector<32x128xf32>
    %2 = tpu.matmul %0, %1, %cst {dimension_numbers = #tpu.dot_dimension_numbers<[1], [0], [0], [1], [0, 0, 1, 1], [], []>} : vector<32x64xbf16>, vector<64x128xbf16>, vector<32x128xf32> -> vector<32x128xf32>
    %c0_3 = arith.constant 0 : index
    %c0_4 = arith.constant 0 : index
    %3 = vector.load %arg3[%c0_3, %c0_4] : memref<1x128xf32, #tpu.memory_space<vmem>>, vector<1x128xf32>
    %4 = vector.broadcast %3 : vector<1x128xf32> to vector<32x128xf32>
    %5 = arith.addf %2, %4 : vector<32x128xf32>
    %6 = arith.negf %5 : vector<32x128xf32>
    %7 = math.exp %6 : vector<32x128xf32>
    %cst_5 = arith.constant 1.000000e+00 : f32
    %8 = vector.broadcast %cst_5 : f32 to vector<32x128xf32>
    %9 = arith.addf %8, %7 : vector<32x128xf32>
    %10 = arith.divf %8, %9 : vector<32x128xf32>
    %11 = arith.mulf %5, %10 : vector<32x128xf32>
    %12 = arith.truncf %11 : vector<32x128xf32> to vector<32x128xbf16>
    %c0_6 = arith.constant 0 : index
    %c0_7 = arith.constant 0 : index
    %13 = vector.load %arg4[%c0_6, %c0_7] : memref<128x128xbf16, #tpu.memory_space<vmem>>, vector<128x128xbf16>
    %cst_8 = arith.constant dense<0.000000e+00> : vector<32x128xf32>
    %14 = tpu.matmul %12, %13, %cst_8 {dimension_numbers = #tpu.dot_dimension_numbers<[1], [0], [0], [1], [0, 0, 1, 1], [], []>} : vector<32x128xbf16>, vector<128x128xbf16>, vector<32x128xf32> -> vector<32x128xf32>
    %c0_9 = arith.constant 0 : index
    %c0_10 = arith.constant 0 : index
    %15 = vector.load %arg5[%c0_9, %c0_10] : memref<1x128xf32, #tpu.memory_space<vmem>>, vector<1x128xf32>
    %16 = vector.broadcast %15 : vector<1x128xf32> to vector<32x128xf32>
    %17 = arith.addf %14, %16 : vector<32x128xf32>
    %18 = arith.truncf %17 : vector<32x128xf32> to vector<32x128xbf16>
    %c0_11 = arith.constant 0 : index
    %c0_12 = arith.constant 0 : index
    %19 = vector.load %arg6[%c0_11, %c0_12] : memref<32x128xbf16, #tpu.memory_space<vmem>>, vector<32x128xbf16>
    tpu.vector_store %arg6[%c0_11, %c0_12], %18 {strides = array<i32>} : memref<32x128xbf16, #tpu.memory_space<vmem>>, vector<32x128xbf16>,
    return
  }
  func.func @transform_0(%arg0: i32) -> (i32, i32) {
    %c0_i32 = arith.constant 0 : i32
    %c0_i32_0 = arith.constant 0 : i32
    return %arg0, %c0_i32 : i32, i32
  }
  func.func @transform_1(%arg0: i32) -> (i32, i32) {
    %c0_i32 = arith.constant 0 : i32
    %c0_i32_0 = arith.constant 0 : i32
    %c0_i32_1 = arith.constant 0 : i32
    return %c0_i32, %c0_i32_0 : i32, i32
  }
  func.func @transform_2(%arg0: i32) -> (i32, i32) {
    %c0_i32 = arith.constant 0 : i32
    %c0_i32_0 = arith.constant 0 : i32
    %c0_i32_1 = arith.constant 0 : i32
    return %c0_i32, %c0_i32_0 : i32, i32
  }
  func.func @transform_3(%arg0: i32) -> (i32, i32) {
    %c0_i32 = arith.constant 0 : i32
    %c0_i32_0 = arith.constant 0 : i32
    %c0_i32_1 = arith.constant 0 : i32
    return %c0_i32, %c0_i32_0 : i32, i32
  }
  func.func @transform_4(%arg0: i32) -> (i32, i32) {
    %c0_i32 = arith.constant 0 : i32
    %c0_i32_0 = arith.constant 0 : i32
    %c0_i32_1 = arith.constant 0 : i32
    return %c0_i32, %c0_i32_0 : i32, i32
  }
  func.func @transform_5(%arg0: i32) -> (i32, i32) {
    %c0_i32 = arith.constant 0 : i32
    %c0_i32_0 = arith.constant 0 : i32
    return %arg0, %c0_i32 : i32, i32
  }
}

</mosaic_0001>

<llo_original>
// kernel: tpu_custom_call.1
$region0: #{tpu_custom_call.1}
  #allocation0 [shape = 'u32[]', space=smem, size = 0x4, offset = 0x4, fixed_abs, tag = 'smem constant byte address 0x4 - core index']
  #allocation1 [shape = 'u32[144,128]{1,0:T(1,128)}', space=vmem, size = 0x12000, scoped, tag = 'internal scratch']
  %s0 = inlined_call_operand.hbm [shape: bf16[64,64], index: 0, kind: input, shape index: {}]
  %s1 = inlined_call_operand.hbm [shape: bf16[64,128], index: 1, kind: input, shape index: {}]
  %s2 = inlined_call_operand.vmem [shape: f32[1,128], index: 2, kind: input, shape index: {}]
  %s3 = inlined_call_operand.hbm [shape: bf16[128,128], index: 3, kind: input, shape index: {}]
  %s4 = inlined_call_operand.vmem [shape: f32[1,128], index: 4, kind: input, shape index: {}]
  %s5 = inlined_call_operand.hbm [shape: bf16[64,128], index: 5, kind: output, shape index: {}]
  %s6 = sld [smem:[#allocation0]]
  $region65: #{tpu_custom_call.1} parent=0
    _
  %s8 = ssub.s32 1, %s6
  %s9 = scalar_select 0, %s8, %s6
  $region1: #{tpu_custom_call.1} parent=0
    #allocation2 [shape = 'u8[16384]{0}', space=vmem, size = 0x4000, scoped, tag = 'input window, operand 0']
    #allocation3 [shape = 's32[2]{0}', space=sflag, size = 0x8, scoped, tag = 'scoped memory for tpu_custom_call.1']
    #allocation4 [shape = 's32[2]{0}', space=sflag, size = 0x8, scoped, tag = 'scoped memory for tpu_custom_call.1']
    #allocation5 [shape = 'u8[16384]{0}', space=vmem, size = 0x4000, scoped, tag = 'input window, operand 1, single buffered']
    #allocation6 [shape = 's32[1]{0}', space=sflag, size = 0x4, scoped, tag = 'scoped memory for tpu_custom_call.1']
    #allocation7 [shape = 'u8[32768]{0}', space=vmem, size = 0x8000, scoped, tag = 'input window, operand 3, single buffered']
    #allocation8 [shape = 'u8[16384]{0}', space=vmem, size = 0x4000, scoped, tag = 'output window, operand 0']
    %10 = vsyncpa [#allocation3], 0
    %s11 = scalar_lea.sflag [#allocation3], 1
    %12 = vsyncpa %s11, 0
    %13 = vsyncpa [#allocation6], 0
    %14 = vsyncpa [#allocation4], 0
    %s15 = scalar_lea.sflag [#allocation4], 1
    %16 = vsyncpa %s15, 0
    loop: start=0, step=1, limit=4
    $region2: #{tpu_custom_call.1} parent=1 // loop_pre_header
      _
    $region3: #{tpu_custom_call.1} parent=1 // loop_header
      %s18 = sphi 0, %s22
      %p19 = scmp.ge.s32.totalorder %s18, 4
      %s28 = sphi 0, %s30
      %s31 = sphi 0, %s28
      %s32 = sphi 0, %s31
      %s48 = sphi 0, %s32
      %s52 = sphi 0, %s52
      %s54 = sphi 0, %s52
      %s55 = sphi 0, %s54
      %s69 = sphi 0, %s55
      %s73 = sphi 0, %s73
      %s75 = sphi 0, %s73
      %s76 = sphi 0, %s75
      %s90 = sphi 0, %s76
      %s94 = sphi 0, %s94
      %s96 = sphi 0, %s94
      %s97 = sphi 0, %s96
      %s111 = sphi 0, %s97
      %s115 = sphi 0, %s115
      %s117 = sphi 0, %s115
      %s118 = sphi 0, %s117
      %s132 = sphi 0, %s118
      %s138 = sphi 0, %s140
      %s141 = sphi 0, %s138
      %s142 = sphi 0, %s141
      %s158 = sphi 0, %s142
    $region4: #{tpu_custom_call.1} parent=1 // loop_header_branch
      %21 = sbr.rel (%p19) target = $region8
    $region5: #{tpu_custom_call.1} parent=1 // loop_body
      %s23 = ssub.s32 %s18, 1
      %s24 = ssub.s32 %s18, 2
      %s25 = sadd.s32 %s18, 1
      %s26 = ssub.s32 %s18, %s25
      %p27 = scmp.eq.s32.totalorder %s26, 0
      %s29 = sadd.s32 %s28, 1
      %s30 = scalar_select %p27, %s28, %s29
      %p33 = pneg %p27
      %p34 = scmp.eq.s32.totalorder %s18, 1
      %p35 = por %p33, %p34
      %p36 = scmp.ne.s32.totalorder %s28, %s31
      %p37 = scmp.eq.s32.totalorder %s18, 0
      %p38 = por %p36, %p37
      %p39 = scmp.ne.s32.totalorder %s28, %s31
      %p40 = scmp.eq.s32.totalorder %s23, 1
      %p41 = por %p39, %p40
      %p42 = scmp.ne.s32.totalorder %s31, %s32
      %p43 = scmp.eq.s32.totalorder %s23, 0
      %p44 = por %p42, %p43
      %p45 = scmp.ne.s32.totalorder %s31, %s32
      %p46 = scmp.eq.s32.totalorder %s24, 1
      %p47 = por %p45, %p46
      %p49 = scmp.ne.s32.totalorder %s32, %s48
      %p50 = scmp.eq.s32.totalorder %s24, 0
      %p51 = por %p49, %p50
      %s53 = sadd.s32 %s52, 1
      %p56 = scmp.eq.s32.totalorder %s18, 1
      %p57 = scmp.ne.s32.totalorder %s52, %s54
      %p58 = scmp.eq.s32.totalorder %s18, 0
      %p59 = por %p57, %p58
      %p60 = scmp.ne.s32.totalorder %s52, %s54
      %p61 = scmp.eq.s32.totalorder %s23, 1
      %p62 = por %p60, %p61
      %p63 = scmp.ne.s32.totalorder %s54, %s55
      %p64 = scmp.eq.s32.totalorder %s23, 0
      %p65 = por %p63, %p64
      %p66 = scmp.ne.s32.totalorder %s54, %s55
      %p67 = scmp.eq.s32.totalorder %s24, 1
      %p68 = por %p66, %p67
      %p70 = scmp.ne.s32.totalorder %s55, %s69
      %p71 = scmp.eq.s32.totalorder %s24, 0
      %p72 = por %p70, %p71
      %s74 = sadd.s32 %s73, 1
      %p77 = scmp.eq.s32.totalorder %s18, 1
      %p78 = scmp.ne.s32.totalorder %s73, %s75
      %p79 = scmp.eq.s32.totalorder %s18, 0
      %p80 = por %p78, %p79
      %p81 = scmp.ne.s32.totalorder %s73, %s75
      %p82 = scmp.eq.s32.totalorder %s23, 1
      %p83 = por %p81, %p82
      %p84 = scmp.ne.s32.totalorder %s75, %s76
      %p85 = scmp.eq.s32.totalorder %s23, 0
      %p86 = por %p84, %p85
      %p87 = scmp.ne.s32.totalorder %s75, %s76
      %p88 = scmp.eq.s32.totalorder %s24, 1
      %p89 = por %p87, %p88
      %p91 = scmp.ne.s32.totalorder %s76, %s90
      %p92 = scmp.eq.s32.totalorder %s24, 0
      %p93 = por %p91, %p92
      %s95 = sadd.s32 %s94, 1
      %p98 = scmp.eq.s32.totalorder %s18, 1
      %p99 = scmp.ne.s32.totalorder %s94, %s96
      %p100 = scmp.eq.s32.totalorder %s18, 0
      %p101 = por %p99, %p100
      %p102 = scmp.ne.s32.totalorder %s94, %s96
      %p103 = scmp.eq.s32.totalorder %s23, 1
      %p104 = por %p102, %p103
      %p105 = scmp.ne.s32.totalorder %s96, %s97
      %p106 = scmp.eq.s32.totalorder %s23, 0
      %p107 = por %p105, %p106
      %p108 = scmp.ne.s32.totalorder %s96, %s97
      %p109 = scmp.eq.s32.totalorder %s24, 1
      %p110 = por %p108, %p109
      %p112 = scmp.ne.s32.totalorder %s97, %s111
      %p113 = scmp.eq.s32.totalorder %s24, 0
      %p114 = por %p112, %p113
      %s116 = sadd.s32 %s115, 1
      %p119 = scmp.eq.s32.totalorder %s18, 1
      %p120 = scmp.ne.s32.totalorder %s115, %s117
      %p121 = scmp.eq.s32.totalorder %s18, 0
      %p122 = por %p120, %p121
      %p123 = scmp.ne.s32.totalorder %s115, %s117
      %p124 = scmp.eq.s32.totalorder %s23, 1
      %p125 = por %p123, %p124
      %p126 = scmp.ne.s32.totalorder %s117, %s118
      %p127 = scmp.eq.s32.totalorder %s23, 0
      %p128 = por %p126, %p127
      %p129 = scmp.ne.s32.totalorder %s117, %s118
      %p130 = scmp.eq.s32.totalorder %s24, 1
      %p131 = por %p129, %p130
      %p133 = scmp.ne.s32.totalorder %s118, %s132
      %p134 = scmp.eq.s32.totalorder %s24, 0
      %p135 = por %p133, %p134
      %s136 = ssub.s32 %s18, %s25
      %p137 = scmp.eq.s32.totalorder %s136, 0
      %s139 = sadd.s32 %s138, 1
      %s140 = scalar_select %p137, %s138, %s139
      %p143 = pneg %p137
      %p144 = scmp.eq.s32.totalorder %s18, 1
      %p145 = por %p143, %p144
      %p146 = scmp.ne.s32.totalorder %s138, %s141
      %p147 = scmp.eq.s32.totalorder %s18, 0
      %p148 = por %p146, %p147
      %p149 = scmp.ne.s32.totalorder %s138, %s141
      %p150 = scmp.eq.s32.totalorder %s23, 1
      %p151 = por %p149, %p150
      %p152 = scmp.ne.s32.totalorder %s141, %s142
      %p153 = scmp.eq.s32.totalorder %s23, 0
      %p154 = por %p152, %p153
      %p155 = scmp.ne.s32.totalorder %s141, %s142
      %p156 = scmp.eq.s32.totalorder %s24, 1
      %p157 = por %p155, %p156
      %p159 = scmp.ne.s32.totalorder %s142, %s158
      %p160 = scmp.eq.s32.totalorder %s24, 0
      %p161 = por %p159, %p160
      %p162 = scmp.le.s32.totalorder 1, %s18
      %p163 = scmp.lt.s32.totalorder %s18, 3
      %p164 = pnand %p162, %p163
      %p165 = pneg %p164
      // Predicated region
      $region9: #{tpu_custom_call.1} parent=5 // pred_check
        _
      $region10: #{tpu_custom_call.1} parent=5 // pred_check_branch
        %167 = sbr.rel (%p164) target = $region12
      $region11: #{tpu_custom_call.1} parent=5 // pred_region
        %s168 = ssub.s32 %s18, 1
        // Predicated region
        $region13: #{tpu_custom_call.1} parent=11 // pred_check
          %p169 = pneg %p65
        $region14: #{tpu_custom_call.1} parent=11 // pred_check_branch
          %171 = sbr.rel (%p169) target = $region16
        $region15: #{tpu_custom_call.1} parent=11 // pred_region
          %s173 = ssub.s32 512, 512
          %174 = vsyncadd [#allocation6], %s173
          %s175 = sshll.u32 [#allocation5], 4
          %s176 = int_to_ptr.vmem [resolvable:$true] %s175
          %181 = dma.hbm_to_vmem [thread:$0]  %s1, 512, %s176, [#allocation6], 64, 64, 4
        $region16: #{tpu_custom_call.1} parent=11 // pred_fallthru
          _
        // Predicated region
        $region17: #{tpu_custom_call.1} parent=11 // pred_check
          %p182 = pneg %p86
        $region18: #{tpu_custom_call.1} parent=11 // pred_check_branch
          %184 = sbr.rel (%p182) target = $region20
        $region19: #{tpu_custom_call.1} parent=11 // pred_region
          _
        $region20: #{tpu_custom_call.1} parent=11 // pred_fallthru
          _
        // Predicated region
        $region21: #{tpu_custom_call.1} parent=11 // pred_check
          %p185 = pneg %p107
        $region22: #{tpu_custom_call.1} parent=11 // pred_check_branch
          %187 = sbr.rel (%p185) target = $region24
        $region23: #{tpu_custom_call.1} parent=11 // pred_region
          %s189 = ssub.s32 1024, 1024
          %190 = vsyncadd [#allocation6], %s189
          %s191 = sshll.u32 [#allocation7], 4
          %s192 = int_to_ptr.vmem [resolvable:$true] %s191
          %197 = dma.hbm_to_vmem [thread:$0]  %s3, 1024, %s192, [#allocation6], 64, 64, 4
        $region24: #{tpu_custom_call.1} parent=11 // pred_fallthru
          _
        // Predicated region
        $region25: #{tpu_custom_call.1} parent=11 // pred_check
          %p198 = pneg %p128
        $region26: #{tpu_custom_call.1} parent=11 // pred_check_branch
          %200 = sbr.rel (%p198) target = $region28
        $region27: #{tpu_custom_call.1} parent=11 // pred_region
          _
        $region28: #{tpu_custom_call.1} parent=11 // pred_fallthru
          _
      $region12: #{tpu_custom_call.1} parent=5 // pred_fallthru
        _
      %p201 = scmp.lt.s32.totalorder %s18, 2
      // Predicated region
      $region29: #{tpu_custom_call.1} parent=5 // pred_check
        %p202 = pneg %p201
      $region30: #{tpu_custom_call.1} parent=5 // pred_check_branch
        %204 = sbr.rel (%p202) target = $region32
      $region31: #{tpu_custom_call.1} parent=5 // pred_region
        // Predicated region
        $region33: #{tpu_custom_call.1} parent=31 // pred_check
          %p205 = pneg %p38
        $region34: #{tpu_custom_call.1} parent=31 // pred_check_branch
          %207 = sbr.rel (%p205) target = $region36
        $region35: #{tpu_custom_call.1} parent=31 // pred_region
          %s208 = sand.u32 %s28, 1
          %s209 = scalar_lea.sflag [#allocation3], %s208
          %s210 = sand.u32 %s28, 1
          %s211 = smul.addr %s210, 16
          %s212 = scalar_lea.vmem [#allocation2], %s211
          %s213 = smul.u32 4, %s18
          %s215 = ssub.s32 256, 256
          %216 = vsyncadd %s209, %s215
          %s217 = smul.addr %s213, 64
          %s218 = scalar_lea.hbm %s0, %s217
          %s219 = sshll.u32 %s212, 4
          %s220 = int_to_ptr.vmem [resolvable:$true] %s219
          %225 = dma.hbm_to_vmem [thread:$0]  %s218, 256, %s220, %s209, 64, 64, 4
        $region36: #{tpu_custom_call.1} parent=31 // pred_fallthru
          _
      $region32: #{tpu_custom_call.1} parent=5 // pred_fallthru
        _
      %p226 = scmp.le.s32.totalorder 1, %s18
      %p227 = scmp.lt.s32.totalorder %s18, 3
      %p228 = pnand %p226, %p227
      %p229 = pneg %p228
      // Predicated region
      $region37: #{tpu_custom_call.1} parent=5 // pred_check
        _
      $region38: #{tpu_custom_call.1} parent=5 // pred_check_branch
        %231 = sbr.rel (%p228) target = $region40
      $region39: #{tpu_custom_call.1} parent=5 // pred_region
        %s232 = ssub.s32 %s18, 1
        %s233 = sand.u32 %s31, 1
        %s234 = scalar_lea.sflag [#allocation3], %s233
        %s235 = sand.u32 %s31, 1
        %s236 = smul.addr %s235, 16
        %s237 = scalar_lea.vmem [#allocation2], %s236
        // Predicated region
        $region41: #{tpu_custom_call.1} parent=39 // pred_check
          %p238 = pneg %p44
        $region42: #{tpu_custom_call.1} parent=39 // pred_check_branch
          %240 = sbr.rel (%p238) target = $region44
        $region43: #{tpu_custom_call.1} parent=39 // pred_region
          %241 = dma.done %s234, 256
        $region44: #{tpu_custom_call.1} parent=39 // pred_fallthru
          _
        // Predicated region
        $region45: #{tpu_custom_call.1} parent=39 // pred_check
          %p242 = pneg %p65
        $region46: #{tpu_custom_call.1} parent=39 // pred_check_branch
          %244 = sbr.rel (%p242) target = $region48
        $region47: #{tpu_custom_call.1} parent=39 // pred_region
          %245 = dma.done [#allocation6], 512
        $region48: #{tpu_custom_call.1} parent=39 // pred_fallthru
          _
        // Predicated region
        $region49: #{tpu_custom_call.1} parent=39 // pred_check
          %p246 = pneg %p107
        $region50: #{tpu_custom_call.1} parent=39 // pred_check_branch
          %248 = sbr.rel (%p246) target = $region52
        $region51: #{tpu_custom_call.1} parent=39 // pred_region
          %249 = dma.done [#allocation6], 1024
        $region52: #{tpu_custom_call.1} parent=39 // pred_fallthru
          _
        %s250 = sand.u32 %s31, 1
        %s251 = scalar_lea.sflag [#allocation3], %s250
        %s252 = sand.u32 %s31, 1
        %s253 = smul.addr %s252, 16
        %s254 = scalar_lea.vmem [#allocation2], %s253
        %p255 = pneg %p44
        %p256 = pneg %p41
        %p257 = pneg %p65
        %p258 = pneg %p62
        %p259 = pneg %p86
        %p260 = pneg %p83
        %p261 = pneg %p107
        %p262 = pneg %p104
        %p263 = pneg %p128
        %p264 = pneg %p125
        %p265 = pneg %p154
        %p266 = pneg %p151
        %s267 = sand.u32 %s141, 1
        %s268 = scalar_lea.sflag [#allocation4], %s267
        %s269 = sand.u32 %s141, 1
        %s270 = smul.addr %s269, 16
        %s271 = scalar_lea.vmem [#allocation8], %s270
        %s272 = smul.u32 4, %s23
        %s273 = smul.u32 4, %s23
        %v275 = vld [vmem:[%s237] sm:$0xf]
        %v276 = vld [vmem:[%s237 + $0x4] sm:$0xf]
        %v277 = vld [vmem:[%s237 + $0x8] sm:$0xf]
        %v278 = vld [vmem:[%s237 + $0xc] sm:$0xf]
        %v279 = vld [vmem:[#allocation5] sm:$0xf]
        %v280 = vld [vmem:[#allocation5 + $0x4] sm:$0xf]
        %v281 = vld [vmem:[#allocation5 + $0x8] sm:$0xf]
        %v282 = vld [vmem:[#allocation5 + $0xc] sm:$0xf]
        %v283 = vld [vmem:[#allocation5 + $0x10] sm:$0xf]
        %v284 = vld [vmem:[#allocation5 + $0x14] sm:$0xf]
        %v285 = vld [vmem:[#allocation5 + $0x18] sm:$0xf]
        %v286 = vld [vmem:[#allocation5 + $0x1c] sm:$0xf]
        %v287 = vld [vmem:[%s2] sm:$0x1]
        %v289 = vlaneseq
        %v290 = vshrl.u32 %v289, 7
        %v291 = vsub.s32 0, %v290
        %v292 = vrot.slane %v287, %v291
        %v298 = vunpack.c.l.b16 %v275
        %v299 = vunpack.c.l.b16 %v276
        %v300 = vunpack.c.l.b16 %v277
        %v301 = vunpack.c.l.b16 %v278
        %v302 = vpack.c.b16 %v299, %v298
        %v303 = vpack.c.b16 %v301, %v300
        %v312 = vunpack.c.l.b16 %v279
        %v313 = vunpack.c.l.b16 %v280
        %v314 = vunpack.c.l.b16 %v281
        %v315 = vunpack.c.l.b16 %v282
        %v316 = vunpack.c.l.b16 %v283
        %v317 = vunpack.c.l.b16 %v284
        %v318 = vunpack.c.l.b16 %v285
        %v319 = vunpack.c.l.b16 %v286
        %v320 = vpack.c.b16 %v313, %v312
        %v321 = vpack.c.b16 %v315, %v314
        %v322 = vpack.c.b16 %v317, %v316
        %v323 = vpack.c.b16 %v319, %v318
        %vm328 = vcmask 523264
        %v330 = vsel %vm328, %v302, 0
        %v333 = vsel %vm328, %v303, 0
        %335 = vmatprep.subr.bf16.mxu0 0
        %336 = vmatpush1.bf16.msra.mxu0 %v320
        %337 = vmatprep.subr.bf16.mxu0 0
        %338 = vmatpush1.bf16.msra.mxu0 %v321
        %339 = vmatprep.subr.bf16.mxu0 0
        %340 = vmatpush1.bf16.msra.mxu0 %v322
        %341 = vmatprep.subr.bf16.mxu0 0
        %342 = vmatpush1.bf16.msra.mxu0 %v323
        %343 = vmatprep.subr.bf16.mxu0 0
        %344 = vmatpush1.bf16.msra.mxu0 0
        %345 = vmatprep.subr.bf16.mxu0 0
        %346 = vmatpush1.bf16.msra.mxu0 0
        %347 = vmatprep.subr.bf16.mxu0 0
        %348 = vmatpush1.bf16.msra.mxu0 0
        %349 = vmatprep.subr.bf16.mxu0 0
        %350 = vmatpush1.bf16.msra.mxu0 0
        %351 = vmatprep.subr.bf16.mxu0 0
        %352 = vmatpush1.bf16.msra.mxu0 0
        %353 = vmatprep.subr.bf16.mxu0 0
        %354 = vmatpush1.bf16.msra.mxu0 0
        %355 = vmatprep.subr.bf16.mxu0 0
        %356 = vmatpush1.bf16.msra.mxu0 0
        %357 = vmatprep.subr.bf16.mxu0 0
        %358 = vmatpush1.bf16.msra.mxu0 0
        %359 = vmatprep.subr.bf16.mxu0 0
        %360 = vmatpush1.bf16.msra.mxu0 0
        %361 = vmatprep.subr.bf16.mxu0 0
        %362 = vmatpush1.bf16.msra.mxu0 0
        %363 = vmatprep.subr.bf16.mxu0 0
        %364 = vmatpush1.bf16.msra.mxu0 0
        %365 = vmatprep.subr.bf16.mxu0 0
        %366 = vmatpush1.bf16.msra.mxu0 0
        %367 = vmatprep.mubr.bf16.mxu0 0
        %368 = vmatmul.mubr.bf16.gmra.mrb[0].mxu0 %v330
        %v369 = vpop.f32.mrb[0].mxu0
        %v370 = vadd.f32 %v292, %v369
        %v371 = vpop.f32.mrb[0].mxu0
        %v372 = vpop.f32.mrb[0].mxu0
        %v373 = vadd.f32 %v292, %v372
        %v374 = vpop.f32.mrb[0].mxu0
        %375 = vmatprep.mubr.bf16.mxu0 0
        %376 = vmatmul.mubr.bf16.gmra.mrb[0].mxu0 %v333
        %v377 = vpop.f32.mrb[0].mxu0
        %v378 = vadd.f32 %v292, %v377
        %v379 = vpop.f32.mrb[0].mxu0
        %v380 = vpop.f32.mrb[0].mxu0
        %v381 = vadd.f32 %v292, %v380
        %v382 = vpop.f32.mrb[0].mxu0
        %383 = vdwg.mxu0
        %v384 = vxor.u32 %v370, 2147483648
        %v385 = vxor.u32 %v373, 2147483648
        %v386 = vxor.u32 %v378, 2147483648
        %v387 = vxor.u32 %v381, 2147483648
        %v388 = vmul.f32 %v384, 1.442695
        %v389 = vpow.pop %v388
        %v390 = vmul.f32 %v385, 1.442695
        %v391 = vpow.pop %v390
        %v392 = vmul.f32 %v386, 1.442695
        %v393 = vpow.pop %v392
        %v394 = vmul.f32 %v387, 1.442695
        %v395 = vpow.pop %v394
        %v396 = vadd.f32 %v389, 1.0
        %v397 = vadd.f32 %v391, 1.0
        %v398 = vadd.f32 %v393, 1.0
        %v399 = vadd.f32 %v395, 1.0
        %v400 = vrcp.pop %v396
        %v401 = vmul.f32 1.0, %v400
        %v402 = vrcp.pop %v397
        %v403 = vmul.f32 1.0, %v402
        %v404 = vrcp.pop %v398
        %v405 = vmul.f32 1.0, %v404
        %v406 = vrcp.pop %v399
        %v407 = vmul.f32 1.0, %v406
        %v408 = vmul.f32 %v370, %v401
        %v409 = vmul.f32 %v373, %v403
        %v410 = vmul.f32 %v378, %v405
        %v411 = vmul.f32 %v381, %v407
        %v412 = vpack.c.bf16 %v409, %v408
        %v413 = vpack.c.bf16 %v411, %v410
        %v414 = vld [vmem:[#allocation7] sm:$0xf]
        %v415 = vld [vmem:[#allocation7 + $0x4] sm:$0xf]
        %v416 = vld [vmem:[#allocation7 + $0x8] sm:$0xf]
        %v417 = vld [vmem:[#allocation7 + $0xc] sm:$0xf]
        %v418 = vld [vmem:[#allocation7 + $0x10] sm:$0xf]
        %v419 = vld [vmem:[#allocation7 + $0x14] sm:$0xf]
        %v420 = vld [vmem:[#allocation7 + $0x18] sm:$0xf]
        %v421 = vld [vmem:[#allocation7 + $0x1c] sm:$0xf]
        %v422 = vld [vmem:[#allocation7 + $0x20] sm:$0xf]
        %v423 = vld [vmem:[#allocation7 + $0x24] sm:$0xf]
        %v424 = vld [vmem:[#allocation7 + $0x28] sm:$0xf]
        %v425 = vld [vmem:[#allocation7 + $0x2c] sm:$0xf]
        %v426 = vld [vmem:[#allocation7 + $0x30] sm:$0xf]
        %v427 = vld [vmem:[#allocation7 + $0x34] sm:$0xf]
        %v428 = vld [vmem:[#allocation7 + $0x38] sm:$0xf]
        %v429 = vld [vmem:[#allocation7 + $0x3c] sm:$0xf]
        %v430 = vld [vmem:[%s4] sm:$0x1]
        %v432 = vlaneseq
        %v433 = vshrl.u32 %v432, 7
        %v434 = vsub.s32 0, %v433
        %v435 = vrot.slane %v430, %v434
        %v453 = vunpack.c.l.b16 %v414
        %v454 = vunpack.c.l.b16 %v415
        %v455 = vunpack.c.l.b16 %v416
        %v456 = vunpack.c.l.b16 %v417
        %v457 = vunpack.c.l.b16 %v418
        %v458 = vunpack.c.l.b16 %v419
        %v459 = vunpack.c.l.b16 %v420
        %v460 = vunpack.c.l.b16 %v421
        %v461 = vunpack.c.l.b16 %v422
        %v462 = vunpack.c.l.b16 %v423
        %v463 = vunpack.c.l.b16 %v424
        %v464 = vunpack.c.l.b16 %v425
        %v465 = vunpack.c.l.b16 %v426
        %v466 = vunpack.c.l.b16 %v427
        %v467 = vunpack.c.l.b16 %v428
        %v468 = vunpack.c.l.b16 %v429
        %v469 = vpack.c.b16 %v454, %v453
        %v470 = vpack.c.b16 %v456, %v455
        %v471 = vpack.c.b16 %v458, %v457
        %v472 = vpack.c.b16 %v460, %v459
        %v473 = vpack.c.b16 %v462, %v461
        %v474 = vpack.c.b16 %v464, %v463
        %v475 = vpack.c.b16 %v466, %v465
        %v476 = vpack.c.b16 %v468, %v467
        %485 = vmatprep.subr.bf16.mxu0 0
        %486 = vmatpush1.bf16.msra.mxu0 %v469
        %487 = vmatprep.subr.bf16.mxu0 0
        %488 = vmatpush1.bf16.msra.mxu0 %v470
        %489 = vmatprep.subr.bf16.mxu0 0
        %490 = vmatpush1.bf16.msra.mxu0 %v471
        %491 = vmatprep.subr.bf16.mxu0 0
        %492 = vmatpush1.bf16.msra.mxu0 %v472
        %493 = vmatprep.subr.bf16.mxu0 0
        %494 = vmatpush1.bf16.msra.mxu0 %v473
        %495 = vmatprep.subr.bf16.mxu0 0
        %496 = vmatpush1.bf16.msra.mxu0 %v474
        %497 = vmatprep.subr.bf16.mxu0 0
        %498 = vmatpush1.bf16.msra.mxu0 %v475
        %499 = vmatprep.subr.bf16.mxu0 0
        %500 = vmatpush1.bf16.msra.mxu0 %v476
        %501 = vmatprep.subr.bf16.mxu0 0
        %502 = vmatpush1.bf16.msra.mxu0 0
        %503 = vmatprep.subr.bf16.mxu0 0
        %504 = vmatpush1.bf16.msra.mxu0 0
        %505 = vmatprep.subr.bf16.mxu0 0
        %506 = vmatpush1.bf16.msra.mxu0 0
        %507 = vmatprep.subr.bf16.mxu0 0
        %508 = vmatpush1.bf16.msra.mxu0 0
        %509 = vmatprep.subr.bf16.mxu0 0
        %510 = vmatpush1.bf16.msra.mxu0 0
        %511 = vmatprep.subr.bf16.mxu0 0
        %512 = vmatpush1.bf16.msra.mxu0 0
        %513 = vmatprep.subr.bf16.mxu0 0
        %514 = vmatpush1.bf16.msra.mxu0 0
        %515 = vmatprep.subr.bf16.mxu0 0
        %516 = vmatpush1.bf16.msra.mxu0 0
        %517 = vmatprep.mubr.bf16.mxu0 0
        %518 = vmatmul.mubr.bf16.gmra.mrb[0].mxu0 %v412
        %v519 = vpop.f32.mrb[0].mxu0
        %v520 = vadd.f32 %v435, %v519
        %v521 = vpop.f32.mrb[0].mxu0
        %v522 = vpop.f32.mrb[0].mxu0
        %v523 = vadd.f32 %v435, %v522
        %v524 = vpop.f32.mrb[0].mxu0
        %525 = vmatprep.mubr.bf16.mxu0 0
        %526 = vmatmul.mubr.bf16.gmra.mrb[0].mxu0 %v413
        %v527 = vpop.f32.mrb[0].mxu0
        %v528 = vadd.f32 %v435, %v527
        %v529 = vpop.f32.mrb[0].mxu0
        %v530 = vpop.f32.mrb[0].mxu0
        %v531 = vadd.f32 %v435, %v530
        %v532 = vpop.f32.mrb[0].mxu0
        %533 = vdwg.mxu0
        %v534 = vpack.c.bf16 %v523, %v520
        %v535 = vpack.c.bf16 %v531, %v528
        %v538 = vunpack.c.l.b16 %v534
        %v539 = vunpack.c.h.b16 %v534
        %v540 = vunpack.c.l.b16 %v535
        %v541 = vunpack.c.h.b16 %v535
        %v542 = vpack.c.b16 %v538, %v538
        %v543 = vpack.c.b16 %v539, %v539
        %v544 = vpack.c.b16 %v540, %v540
        %v545 = vpack.c.b16 %v541, %v541
        %550 = vst [vmem:[%s271] sm:$0xf] %v542
        %551 = vst [vmem:[%s271 + $0x4] sm:$0xf] %v543
        %552 = vst [vmem:[%s271 + $0x8] sm:$0xf] %v544
        %553 = vst [vmem:[%s271 + $0xc] sm:$0xf] %v545
        %s554 = sand.u32 %s141, 1
        %s555 = scalar_lea.sflag [#allocation4], %s554
        %s556 = sand.u32 %s141, 1
        %s557 = smul.addr %s556, 16
        %s558 = scalar_lea.vmem [#allocation8], %s557
        // Predicated region
        $region53: #{tpu_custom_call.1} parent=39 // pred_check
          %p559 = pneg %p151
        $region54: #{tpu_custom_call.1} parent=39 // pred_check_branch
          %561 = sbr.rel (%p559) target = $region56
        $region55: #{tpu_custom_call.1} parent=39 // pred_region
          %s562 = smul.u32 4, %s23
          %s564 = ssub.s32 256, 256
          %565 = vsyncadd %s555, %s564
          %s566 = smul.addr %s562, 64
          %s567 = scalar_lea.hbm %s5, %s566
          %s568 = sshll.u32 %s558, 4
          %s569 = int_to_ptr.vmem [resolvable:$true] %s568
          %574 = dma.vmem_to_hbm [thread:$0]  %s569, 256, %s567, %s555, 64, 64, 4
        $region56: #{tpu_custom_call.1} parent=39 // pred_fallthru
          _
      $region40: #{tpu_custom_call.1} parent=5 // pred_fallthru
        _
      %p575 = scmp.le.s32.totalorder 2, %s18
      // Predicated region
      $region57: #{tpu_custom_call.1} parent=5 // pred_check
        %p576 = pneg %p575
      $region58: #{tpu_custom_call.1} parent=5 // pred_check_branch
        %578 = sbr.rel (%p576) target = $region60
      $region59: #{tpu_custom_call.1} parent=5 // pred_region
        %s579 = ssub.s32 %s18, 2
        // Predicated region
        $region61: #{tpu_custom_call.1} parent=59 // pred_check
          %p580 = pneg %p157
        $region62: #{tpu_custom_call.1} parent=59 // pred_check_branch
          %582 = sbr.rel (%p580) target = $region64
        $region63: #{tpu_custom_call.1} parent=59 // pred_region
          %s583 = sand.u32 %s142, 1
          %s584 = scalar_lea.sflag [#allocation4], %s583
          %s585 = sand.u32 %s142, 1
          %s586 = smul.addr %s585, 16
          %s587 = scalar_lea.vmem [#allocation8], %s586
          %588 = dma.done %s584, 256
        $region64: #{tpu_custom_call.1} parent=59 // pred_fallthru
          _
      $region60: #{tpu_custom_call.1} parent=5 // pred_fallthru
        _
    $region6: #{tpu_custom_call.1} parent=1 // loop_footer
      %s22 = sadd.s32 1, %s18
    $region7: #{tpu_custom_call.1} parent=1 // loop_footer_branch
      %17 = sbr.rel target = $region3
    $region8: #{tpu_custom_call.1} parent=1 // loop_exit
      _
    %589 = vsyncpa [#allocation3], 1
    %s590 = scalar_lea.sflag [#allocation3], 1
    %591 = vsyncpa %s590, 1
    %592 = vsyncpa [#allocation6], 1
    %593 = vsyncpa [#allocation4], 1
    %s594 = scalar_lea.sflag [#allocation4], 1
    %595 = vsyncpa %s594, 1

</llo_original>
